<compile_context>
chip_gen: v7x
topology: tpu7x:2x2x1
jax: 0.10.0
libtpu: 0.0.40
codegen_flags: <defaults>
</compile_context>

<pallas_src>
import functools
import math
from functools import partial

import jax
import jax.numpy as jnp
from jax.experimental import pallas as pl
from jax.experimental.pallas import tpu as pltpu


# --------------------------------------------------------------------------
# Runtime capability probes (cached; run eagerly once, outside the main jit).
# --------------------------------------------------------------------------
@functools.lru_cache(maxsize=None)
def _single_buffering_supported():
    """True iff BlockSpec(pipeline_mode=pl.Buffered(1)) compiles, runs and is correct."""
    def copy_k(x_ref, o_ref):
        o_ref[...] = x_ref[...]
    try:
        x = jnp.arange(16 * 128, dtype=jnp.float32).reshape(16, 128)
        f = pl.pallas_call(
            copy_k,
            out_shape=jax.ShapeDtypeStruct((16, 128), jnp.float32),
            grid=(2,),
            in_specs=[pl.BlockSpec((8, 128), lambda i: (i, 0),
                                   pipeline_mode=pl.Buffered(1))],
            out_specs=pl.BlockSpec((8, 128), lambda i: (i, 0)))
        y = jax.block_until_ready(f(x))
        return bool(jnp.all(y == x))
    except Exception:
        return False


@functools.lru_cache(maxsize=None)
def _vmem_capacity_bytes():
    try:
        return int(pltpu.get_tpu_info().vmem_capacity_bytes)
    except Exception:
        return 64 * 1024 * 1024          # conservative (v7x per-core VMEM)


def _spec(shape, index_map, single_buffer):
    if single_buffer:
        return pl.BlockSpec(shape, index_map, pipeline_mode=pl.Buffered(1))
    return pl.BlockSpec(shape, index_map)


# --------------------------------------------------------------------------
# Kernels: 3 kw-fused taps, pure acc += dot chain, bias-initialized acc.
# --------------------------------------------------------------------------
def _make_whole_kernel(wop: int):
    """Whole-image phases resident in VMEM; slices picked per row block."""

    def kernel(pa_ref, pb_ref, w_ref, b_ref, o_ref):
        # pa_ref/pb_ref: ((Hop+1)*Wop, 3C)  kw-fused phases (row parity 0 / 1)
        # w_ref        : (3, 3C, Coutp)     per-kh weights (kw folded into K)
        # b_ref        : (1, Coutp)         f32 bias
        # o_ref        : (row_tile*Wop, Coutp)
        m, coutp = o_ref.shape
        base = pl.multiple_of(pl.program_id(1) * m, 8)
        acc = jnp.broadcast_to(b_ref[...], (m, coutp))          # f32 init
        acc = acc + jnp.dot(pa_ref[pl.ds(base, m), :], w_ref[0],
                            preferred_element_type=jnp.float32)  # kh = 0
        acc = acc + jnp.dot(pb_ref[pl.ds(base, m), :], w_ref[1],
                            preferred_element_type=jnp.float32)  # kh = 1
        start2 = pl.multiple_of(base + wop, 8)
        acc = acc + jnp.dot(pa_ref[pl.ds(start2, m), :], w_ref[2],
                            preferred_element_type=jnp.float32)  # kh = 2
        o_ref[...] = acc.astype(o_ref.dtype)

    return kernel


def _blocked_kernel(s0_ref, s1_ref, s2_ref, w_ref, b_ref, o_ref):
    """Row-blocked phase slabs (one per kh tap); VMEM = O(block_m * 3C)."""
    m, coutp = o_ref.shape
    acc = jnp.broadcast_to(b_ref[...], (m, coutp))
    acc = acc + jnp.dot(s0_ref[...], w_ref[0], preferred_element_type=jnp.float32)
    acc = acc + jnp.dot(s1_ref[...], w_ref[1], preferred_element_type=jnp.float32)
    acc = acc + jnp.dot(s2_ref[...], w_ref[2], preferred_element_type=jnp.float32)
    o_ref[...] = acc.astype(o_ref.dtype)


# --------------------------------------------------------------------------
# Wrapper
# --------------------------------------------------------------------------
@partial(jax.jit, static_argnames=("compute_dtype", "row_tile", "target_block_m",
                                   "buffered_ok", "vmem_capacity"))
def _downsample_conv(x_nchw, weight, bias, *, compute_dtype=jnp.bfloat16,
                     row_tile=None, target_block_m=1024,
                     buffered_ok=False, vmem_capacity=64 * 1024 * 1024):
    N, C, H, W = x_nchw.shape
    Cout, Cin, KH, KW = weight.shape
    assert (Cin, KH, KW) == (C, 3, 3), "DownSample expects a 3x3 CxC conv"

    Ho = (H - 1) // 2 + 1                 # output size for k=3, s=2, p=1
    Wo = (W - 1) // 2 + 1
    Coutp = pl.cdiv(Cout, 128) * 128      # lane-dense output channels
    Wop = max(8, pl.cdiv(Wo, 8) * 8)      # sublane-aligned phase/output pitch
    K3 = 3 * C                            # kw-fused contraction depth

    out_dtype = x_nchw.dtype
    esize = jnp.dtype(compute_dtype).itemsize
    osize = jnp.dtype(out_dtype).itemsize

    # ---- capacity-aware buffering / tiling decisions -----------------------
    budget = int(0.8 * vmem_capacity)
    phase_bufs = 1 if buffered_ok else 2
    w_bufs = 1 if buffered_ok else 2
    w_bytes = w_bufs * (3 * K3 * Coutp * esize + Coutp * 4)

    def out_bytes(bm):                     # output double-buffer + f32 acc temps
        return 2 * bm * Coutp * osize + 2 * bm * Coutp * 4

    def whole_need(hop, bm):
        return phase_bufs * 2 * (hop + 1) * Wop * K3 * esize + w_bytes + out_bytes(bm)

    def blocked_need(bm):
        return 2 * 3 * bm * K3 * esize + w_bytes + out_bytes(bm)

    rt = max(1, target_block_m // Wop) if row_tile is None else int(row_tile)
    rt = max(1, min(rt, Ho))
    nblocks = pl.cdiv(Ho, rt)
    rt = pl.cdiv(Ho, nblocks)              # balance blocks -> minimal pad waste
    Hop = nblocks * rt
    block_m = rt * Wop

    if whole_need(Hop, block_m) <= budget:
        mode = "whole"
    else:
        mode = "blocked"                   # bounded VMEM for very large maps
        while blocked_need(block_m) > budget and rt > 1:
            rt = max(1, rt // 2)
            nblocks = pl.cdiv(Ho, rt)
            rt = pl.cdiv(Ho, nblocks)
            Hop = nblocks * rt
            block_m = rt * Wop

    Mrows = (Hop + 1) * Wop
    need = whole_need(Hop, block_m) if mode == "whole" else blocked_need(block_m)
    vmem_limit = int(min(max(int(1.5 * need), 32 * 1024 * 1024), vmem_capacity))

    # ---- layout glue (fused by XLA under jit): NCHW->NHWC, cast, zero-pad,
    #      two kw-fused stride-2 phase views (no 9x im2col tensor). ----------
    x = jnp.transpose(x_nchw, (0, 2, 3, 1)).astype(compute_dtype)     # NHWC
    pad_b = 2 * Hop + 1 - H
    pad_r = 2 * Wop + 1 - W
    xp = jnp.pad(x, ((0, 0), (1, pad_b), (1, pad_r), (0, 0)))

    def phase(a):                          # row parity a, kw taps fused along C
        taps = [xp[:, a:a + 2 * Hop + 1:2, kw:kw + 2 * Wop - 1:2, :]
                for kw in range(3)]
        return jnp.concatenate(taps, axis=-1).reshape(N, Mrows, K3)

    pA = phase(0)                          # used by kh = 0 and kh = 2
    pB = phase(1)                          # used by kh = 1

    # weight (Cout, Cin, kh, kw) -> (3, 3C, Coutp); bias -> (1, Coutp) f32
    wt = jnp.transpose(weight, (2, 3, 1, 0)).reshape(3, K3, Cout)
    wt = jnp.pad(wt, ((0, 0), (0, 0), (0, Coutp - Cout))).astype(compute_dtype)
    bp = jnp.pad(bias.astype(jnp.float32), (0, Coutp - Cout)).reshape(1, Coutp)

    wspec = _spec((3, K3, Coutp), lambda n, r: (0, 0, 0), buffered_ok)
    bspec = _spec((1, Coutp), lambda n, r: (0, 0), buffered_ok)
    out_spec = pl.BlockSpec((None, block_m, Coutp), lambda n, r: (n, r, 0))

    if mode == "whole":
        phase_spec = _spec((None, Mrows, K3), lambda n, r: (n, 0, 0), buffered_ok)
        in_specs = [phase_spec, phase_spec, wspec, bspec]
        kernel = _make_whole_kernel(Wop)
        operands = (pA, pB, wt, bp)
        phase_hbm = 2 * N * Mrows * K3 * esize
    else:
        slab_spec = pl.BlockSpec((None, block_m, K3), lambda n, r: (n, r, 0))
        s0 = pA[:, :Hop * Wop, :]                  # kh = 0
        s1 = pB[:, :Hop * Wop, :]                  # kh = 1
        s2 = pA[:, Wop:Wop + Hop * Wop, :]         # kh = 2 (shifted one row)
        in_specs = [slab_spec, slab_spec, slab_spec, wspec, bspec]
        kernel = _blocked_kernel
        operands = (s0, s1, s2, wt, bp)
        phase_hbm = 3 * N * Hop * Wop * K3 * esize

    cost = pl.CostEstimate(
        flops=2 * N * Hop * Wop * 9 * C * Coutp,
        transcendentals=0,
        bytes_accessed=int(phase_hbm + 3 * K3 * Coutp * esize + Coutp * 4
                           + N * Hop * Wop * Coutp * osize))

    out_flat = pl.pallas_call(
        kernel,
        out_shape=jax.ShapeDtypeStruct((N, Hop * Wop, Coutp), out_dtype),
        grid=(N, nblocks),
        in_specs=in_specs,
        out_specs=out_spec,
        compiler_params=pltpu.CompilerParams(
            dimension_semantics=("parallel", "parallel"),
            vmem_limit_bytes=vmem_limit),
        cost_estimate=cost,
    )(*operands)

    out = out_flat.reshape(N, Hop, Wop, Coutp)[:, :Ho, :Wo, :Cout]
    return jnp.transpose(out, (0, 3, 1, 2))        # back to NCHW


def downsample_forward(x_nchw, temb, weight, bias, **kwargs):
    """Equivalent of DownSample.forward(x, temb); temb is ignored (as in PyTorch)."""
    del temb
    kwargs.setdefault("buffered_ok", _single_buffering_supported())
    kwargs.setdefault("vmem_capacity", _vmem_capacity_bytes())
    return _downsample_conv(x_nchw, weight, bias, **kwargs)


if __name__ == "__main__":
    key = jax.random.PRNGKey(0)
    k1, k2, k3, k4 = jax.random.split(key, 4)
    N, C, H, W = 2, 4, 16, 16
    x = jax.random.normal(k1, (N, C, H, W), jnp.float32)
    temb = jax.random.normal(k2, (N, 32), jnp.float32)   # unused, as in PyTorch

    fan_in = C * 3 * 3
    bound = 1.0 / math.sqrt(fan_in)
    weight = jax.random.uniform(k3, (C, C, 3, 3), jnp.float32, -bound, bound)
    bias = jax.random.uniform(k4, (C,), jnp.float32, -bound, bound)

    ref = jax.lax.conv_general_dilated(
        x, weight, window_strides=(2, 2), padding=((1, 1), (1, 1)),
        dimension_numbers=("NCHW", "OIHW", "NCHW")) + bias[None, :, None, None]

    # f32 path: tight check of the phase/tap indexing.
    out_f32 = jax.block_until_ready(
        downsample_forward(x, temb, weight, bias, compute_dtype=jnp.float32))
    assert out_f32.shape == (N, C, H // 2, W // 2)
    assert float(jnp.max(jnp.abs(out_f32 - ref))) < 2e-3, "f32 mismatch"

    # bf16 operands (production default), f32 MXU accumulation.
    out_bf16 = jax.block_until_ready(downsample_forward(x, temb, weight, bias))
    assert out_bf16.shape == (N, C, H // 2, W // 2)
    assert float(jnp.max(jnp.abs(out_bf16 - ref))) < 5e-2, "bf16 mismatch"

    print("KERNEL_OK")
</pallas_src>

<mosaic_0001>
module attributes {stable_mosaic.version = 11 : i64} {
  func.func @copy_k(%arg0: i32, %arg1: memref<8x128xf32, #tpu.memory_space<vmem>>, %arg2: memref<8x128xf32, #tpu.memory_space<vmem>>) attributes {dimension_semantics = [#tpu.dimension_semantics<arbitrary>], iteration_bounds = array<i64: 2>, scalar_prefetch = 0 : i64, scratch_operands = 0 : i64, tpu.core_type = #tpu.core_type<tc>, window_params = [{pipeline_mode = #tpu.pipeline_mode<synchronous>, transform_indices = @transform_0, window_bounds = array<i64: 8, 128>}, {transform_indices = @transform_1, window_bounds = array<i64: 8, 128>}]} {
    %c0 = arith.constant 0 : index
    %c0_0 = arith.constant 0 : index
    %0 = vector.load %arg1[%c0, %c0_0] : memref<8x128xf32, #tpu.memory_space<vmem>>, vector<8x128xf32>
    %c0_1 = arith.constant 0 : index
    %c0_2 = arith.constant 0 : index
    %1 = vector.load %arg2[%c0_1, %c0_2] : memref<8x128xf32, #tpu.memory_space<vmem>>, vector<8x128xf32>
    tpu.vector_store %arg2[%c0_1, %c0_2], %0 {strides = array<i32>} : memref<8x128xf32, #tpu.memory_space<vmem>>, vector<8x128xf32>,
    return
  }
  func.func @transform_0(%arg0: i32) -> (i32, i32) {
    %c0_i32 = arith.constant 0 : i32
    %c0_i32_0 = arith.constant 0 : i32
    return %arg0, %c0_i32 : i32, i32
  }
  func.func @transform_1(%arg0: i32) -> (i32, i32) {
    %c0_i32 = arith.constant 0 : i32
    %c0_i32_0 = arith.constant 0 : i32
    return %arg0, %c0_i32 : i32, i32
  }
}

module attributes {stable_mosaic.version = 11 : i64} {
  func.func @kernel(%arg0: i32, %arg1: i32, %arg2: memref<1x72x12xf32, #tpu.memory_space<vmem>>, %arg3: memref<1x72x12xf32, #tpu.memory_space<vmem>>, %arg4: memref<3x12x128xf32, #tpu.memory_space<vmem>>, %arg5: memref<1x128xf32, #tpu.memory_space<vmem>>, %arg6: memref<1x64x128xf32, #tpu.memory_space<vmem>>) attributes {dimension_semantics = [#tpu.dimension_semantics<parallel>, #tpu.dimension_semantics<parallel>], iteration_bounds = array<i64: 2, 1>, scalar_prefetch = 0 : i64, scratch_operands = 0 : i64, tpu.core_type = #tpu.core_type<tc>, window_params = [{transform_indices = @transform_0, window_bounds = array<i64: 1, 72, 12>}, {transform_indices = @transform_1, window_bounds = array<i64: 1, 72, 12>}, {pipeline_mode = #tpu.pipeline_mode<synchronous>, transform_indices = @transform_2, window_bounds = array<i64: 3, 12, 128>}, {pipeline_mode = #tpu.pipeline_mode<synchronous>, transform_indices = @transform_3, window_bounds = array<i64: 1, 128>}, {transform_indices = @transform_4, window_bounds = array<i64: 1, 64, 128>}]} {
    %c64_i32 = arith.constant 64 : i32
    %0 = arith.muli %arg1, %c64_i32 : i32
    %1 = tpu.assume_multiple %0, 8 : i32
    %c0 = arith.constant 0 : index
    %c0_0 = arith.constant 0 : index
    %2 = vector.load %arg5[%c0, %c0_0] : memref<1x128xf32, #tpu.memory_space<vmem>>, vector<1x128xf32>
    %3 = vector.shape_cast %2 : vector<1x128xf32> to vector<1x128xf32>
    %4 = vector.broadcast %3 : vector<1x128xf32> to vector<64x128xf32>
    %c0_1 = arith.constant 0 : index
    %5 = arith.index_cast %1 : i32 to index
    %c0_2 = arith.constant 0 : index
    %6 = vector.load %arg2[%c0_1, %5, %c0_2] : memref<1x72x12xf32, #tpu.memory_space<vmem>>, vector<1x64x12xf32>
    %7 = vector.shape_cast %6 : vector<1x64x12xf32> to vector<64x12xf32>
    %c0_3 = arith.constant 0 : index
    %c0_4 = arith.constant 0 : index
    %c0_5 = arith.constant 0 : index
    %8 = vector.load %arg4[%c0_3, %c0_4, %c0_5] : memref<3x12x128xf32, #tpu.memory_space<vmem>>, vector<1x12x128xf32>
    %9 = vector.shape_cast %8 : vector<1x12x128xf32> to vector<12x128xf32>
    %cst = arith.constant dense<0.000000e+00> : vector<64x128xf32>
    %10 = tpu.matmul %7, %9, %cst {dimension_numbers = #tpu.dot_dimension_numbers<[1], [0], [0], [1], [0, 0, 1, 1], [], []>} : vector<64x12xf32>, vector<12x128xf32>, vector<64x128xf32> -> vector<64x128xf32>
    %11 = arith.addf %4, %10 : vector<64x128xf32>
    %c0_6 = arith.constant 0 : index
    %12 = arith.index_cast %1 : i32 to index
    %c0_7 = arith.constant 0 : index
    %13 = vector.load %arg3[%c0_6, %12, %c0_7] : memref<1x72x12xf32, #tpu.memory_space<vmem>>, vector<1x64x12xf32>
    %14 = vector.shape_cast %13 : vector<1x64x12xf32> to vector<64x12xf32>
    %c1 = arith.constant 1 : index
    %c0_8 = arith.constant 0 : index
    %c0_9 = arith.constant 0 : index
    %15 = vector.load %arg4[%c1, %c0_8, %c0_9] : memref<3x12x128xf32, #tpu.memory_space<vmem>>, vector<1x12x128xf32>
    %16 = vector.shape_cast %15 : vector<1x12x128xf32> to vector<12x128xf32>
    %cst_10 = arith.constant dense<0.000000e+00> : vector<64x128xf32>
    %17 = tpu.matmul %14, %16, %cst_10 {dimension_numbers = #tpu.dot_dimension_numbers<[1], [0], [0], [1], [0, 0, 1, 1], [], []>} : vector<64x12xf32>, vector<12x128xf32>, vector<64x128xf32> -> vector<64x128xf32>
    %18 = arith.addf %11, %17 : vector<64x128xf32>
    %c8_i32 = arith.constant 8 : i32
    %19 = arith.addi %1, %c8_i32 : i32
    %20 = tpu.assume_multiple %19, 8 : i32
    %c0_11 = arith.constant 0 : index
    %21 = arith.index_cast %20 : i32 to index
    %c0_12 = arith.constant 0 : index
    %22 = vector.load %arg2[%c0_11, %21, %c0_12] : memref<1x72x12xf32, #tpu.memory_space<vmem>>, vector<1x64x12xf32>
    %23 = vector.shape_cast %22 : vector<1x64x12xf32> to vector<64x12xf32>
    %c2 = arith.constant 2 : index
    %c0_13 = arith.constant 0 : index
    %c0_14 = arith.constant 0 : index
    %24 = vector.load %arg4[%c2, %c0_13, %c0_14] : memref<3x12x128xf32, #tpu.memory_space<vmem>>, vector<1x12x128xf32>
    %25 = vector.shape_cast %24 : vector<1x12x128xf32> to vector<12x128xf32>
    %cst_15 = arith.constant dense<0.000000e+00> : vector<64x128xf32>
    %26 = tpu.matmul %23, %25, %cst_15 {dimension_numbers = #tpu.dot_dimension_numbers<[1], [0], [0], [1], [0, 0, 1, 1], [], []>} : vector<64x12xf32>, vector<12x128xf32>, vector<64x128xf32> -> vector<64x128xf32>
    %27 = arith.addf %18, %26 : vector<64x128xf32>
    %c0_16 = arith.constant 0 : index
    %c0_17 = arith.constant 0 : index
    %c0_18 = arith.constant 0 : index
    %28 = vector.load %arg6[%c0_16, %c0_17, %c0_18] : memref<1x64x128xf32, #tpu.memory_space<vmem>>, vector<1x64x128xf32>
    %29 = vector.shape_cast %28 : vector<1x64x128xf32> to vector<64x128xf32>
    %30 = vector.shape_cast %27 : vector<64x128xf32> to vector<1x64x128xf32>
    tpu.vector_store %arg6[%c0_16, %c0_17, %c0_18], %30 {strides = array<i32>} : memref<1x64x128xf32, #tpu.memory_space<vmem>>, vector<1x64x128xf32>,
    return
  }
  func.func @transform_0(%arg0: i32, %arg1: i32) -> (i32, i32, i32) {
    %c0_i32 = arith.constant 0 : i32
    %c0_i32_0 = arith.constant 0 : i32
    %c0_i32_1 = arith.constant 0 : i32
    return %arg0, %c0_i32, %c0_i32_0 : i32, i32, i32
  }
  func.func @transform_1(%arg0: i32, %arg1: i32) -> (i32, i32, i32) {
    %c0_i32 = arith.constant 0 : i32
    %c0_i32_0 = arith.constant 0 : i32
    %c0_i32_1 = arith.constant 0 : i32
    return %arg0, %c0_i32, %c0_i32_0 : i32, i32, i32
  }
  func.func @transform_2(%arg0: i32, %arg1: i32) -> (i32, i32, i32) {
    %c0_i32 = arith.constant 0 : i32
    %c0_i32_0 = arith.constant 0 : i32
    %c0_i32_1 = arith.constant 0 : i32
    %c0_i32_2 = arith.constant 0 : i32
    return %c0_i32, %c0_i32_0, %c0_i32_1 : i32, i32, i32
  }
  func.func @transform_3(%arg0: i32, %arg1: i32) -> (i32, i32) {
    %c0_i32 = arith.constant 0 : i32
    %c0_i32_0 = arith.constant 0 : i32
    %c0_i32_1 = arith.constant 0 : i32
    return %c0_i32, %c0_i32_0 : i32, i32
  }
  func.func @transform_4(%arg0: i32, %arg1: i32) -> (i32, i32, i32) {
    %c0_i32 = arith.constant 0 : i32
    %c0_i32_0 = arith.constant 0 : i32
    return %arg0, %arg1, %c0_i32 : i32, i32, i32
  }
}

</mosaic_0001>

<llo_original>
// kernel: tpu_custom_call.1
$region0: #{tpu_custom_call.1}
  #allocation0 [shape = 'u32[]', space=smem, size = 0x4, offset = 0x4, fixed_abs, tag = 'smem constant byte address 0x4 - core index']
  #allocation1 [shape = 'u32[144,128]{1,0:T(1,128)}', space=vmem, size = 0x12000, scoped, tag = 'internal scratch']
  %s0 = inlined_call_operand.hbm [shape: f32[16,128], index: 0, kind: input, shape index: {}]
  %s1 = inlined_call_operand.hbm [shape: f32[16,128], index: 1, kind: output, shape index: {}]
  %s2 = sld [smem:[#allocation0]]
  $region41: #{tpu_custom_call.1} parent=0
    _
  %s4 = ssub.s32 1, %s2
  %s5 = scalar_select 0, %s4, %s2
  $region1: #{tpu_custom_call.1} parent=0
    #allocation2 [shape = 'u8[4096]{0}', space=vmem, size = 0x1000, scoped, tag = 'input window, operand 0, single buffered']
    #allocation3 [shape = 's32[2]{0}', space=sflag, size = 0x8, scoped, tag = 'scoped memory for tpu_custom_call.1']
    #allocation4 [shape = 's32[2]{0}', space=sflag, size = 0x8, scoped, tag = 'scoped memory for tpu_custom_call.1']
    #allocation5 [shape = 'u8[8192]{0}', space=vmem, size = 0x2000, scoped, tag = 'output window, operand 0']
    %6 = vsyncpa [#allocation3], 0
    %7 = vsyncpa [#allocation4], 0
    %s8 = scalar_lea.sflag [#allocation4], 1
    %9 = vsyncpa %s8, 0
    loop: start=0, step=1, limit=4
    $region2: #{tpu_custom_call.1} parent=1 // loop_pre_header
      _
    $region3: #{tpu_custom_call.1} parent=1 // loop_header
      %s11 = sphi 0, %s15
      %p12 = scmp.ge.s32.totalorder %s11, 4
      %s21 = sphi 0, %s23
      %s24 = sphi 0, %s21
      %s25 = sphi 0, %s24
      %s41 = sphi 0, %s25
      %s47 = sphi 0, %s49
      %s50 = sphi 0, %s47
      %s51 = sphi 0, %s50
      %s67 = sphi 0, %s51
    $region4: #{tpu_custom_call.1} parent=1 // loop_header_branch
      %14 = sbr.rel (%p12) target = $region8
    $region5: #{tpu_custom_call.1} parent=1 // loop_body
      %s16 = ssub.s32 %s11, 1
      %s17 = ssub.s32 %s11, 2
      %s18 = sadd.s32 %s11, 1
      %s19 = ssub.s32 %s11, %s18
      %p20 = scmp.eq.s32.totalorder %s19, 0
      %s22 = sadd.s32 %s21, 1
      %s23 = scalar_select %p20, %s21, %s22
      %p26 = pneg %p20
      %p27 = scmp.eq.s32.totalorder %s11, 1
      %p28 = por %p26, %p27
      %p29 = scmp.ne.s32.totalorder %s21, %s24
      %p30 = scmp.eq.s32.totalorder %s11, 0
      %p31 = por %p29, %p30
      %p32 = scmp.ne.s32.totalorder %s21, %s24
      %p33 = scmp.eq.s32.totalorder %s16, 1
      %p34 = por %p32, %p33
      %p35 = scmp.ne.s32.totalorder %s24, %s25
      %p36 = scmp.eq.s32.totalorder %s16, 0
      %p37 = por %p35, %p36
      %p38 = scmp.ne.s32.totalorder %s24, %s25
      %p39 = scmp.eq.s32.totalorder %s17, 1
      %p40 = por %p38, %p39
      %p42 = scmp.ne.s32.totalorder %s25, %s41
      %p43 = scmp.eq.s32.totalorder %s17, 0
      %p44 = por %p42, %p43
      %s45 = ssub.s32 %s11, %s18
      %p46 = scmp.eq.s32.totalorder %s45, 0
      %s48 = sadd.s32 %s47, 1
      %s49 = scalar_select %p46, %s47, %s48
      %p52 = pneg %p46
      %p53 = scmp.eq.s32.totalorder %s11, 1
      %p54 = por %p52, %p53
      %p55 = scmp.ne.s32.totalorder %s47, %s50
      %p56 = scmp.eq.s32.totalorder %s11, 0
      %p57 = por %p55, %p56
      %p58 = scmp.ne.s32.totalorder %s47, %s50
      %p59 = scmp.eq.s32.totalorder %s16, 1
      %p60 = por %p58, %p59
      %p61 = scmp.ne.s32.totalorder %s50, %s51
      %p62 = scmp.eq.s32.totalorder %s16, 0
      %p63 = por %p61, %p62
      %p64 = scmp.ne.s32.totalorder %s50, %s51
      %p65 = scmp.eq.s32.totalorder %s17, 1
      %p66 = por %p64, %p65
      %p68 = scmp.ne.s32.totalorder %s51, %s67
      %p69 = scmp.eq.s32.totalorder %s17, 0
      %p70 = por %p68, %p69
      %p71 = scmp.le.s32.totalorder 1, %s11
      %p72 = scmp.lt.s32.totalorder %s11, 3
      %p73 = pnand %p71, %p72
      %p74 = pneg %p73
      // Predicated region
      $region9: #{tpu_custom_call.1} parent=5 // pred_check
        _
      $region10: #{tpu_custom_call.1} parent=5 // pred_check_branch
        %76 = sbr.rel (%p73) target = $region12
      $region11: #{tpu_custom_call.1} parent=5 // pred_region
        %s77 = ssub.s32 %s11, 1
        // Predicated region
        $region13: #{tpu_custom_call.1} parent=11 // pred_check
          %p78 = pneg %p37
        $region14: #{tpu_custom_call.1} parent=11 // pred_check_branch
          %80 = sbr.rel (%p78) target = $region16
        $region15: #{tpu_custom_call.1} parent=11 // pred_region
          %s82 = ssub.s32 128, 128
          %83 = vsyncadd [#allocation3], %s82
          %s84 = smul.addr %s16, 128
          %s85 = scalar_lea.hbm %s0, %s84
          %s87 = sshll.u32 [#allocation2], 4
          %s88 = int_to_ptr.vmem [resolvable:$true] %s87
          %90 = dma.hbm_to_vmem [thread:$0]  %s85, 128, %s88, [#allocation3]
        $region16: #{tpu_custom_call.1} parent=11 // pred_fallthru
          _
      $region12: #{tpu_custom_call.1} parent=5 // pred_fallthru
        _
      %p91 = scmp.lt.s32.totalorder %s11, 2
      // Predicated region
      $region17: #{tpu_custom_call.1} parent=5 // pred_check
        %p92 = pneg %p91
      $region18: #{tpu_custom_call.1} parent=5 // pred_check_branch
        %94 = sbr.rel (%p92) target = $region20
      $region19: #{tpu_custom_call.1} parent=5 // pred_region
        _
      $region20: #{tpu_custom_call.1} parent=5 // pred_fallthru
        _
      %p95 = scmp.le.s32.totalorder 1, %s11
      %p96 = scmp.lt.s32.totalorder %s11, 3
      %p97 = pnand %p95, %p96
      %p98 = pneg %p97
      // Predicated region
      $region21: #{tpu_custom_call.1} parent=5 // pred_check
        _
      $region22: #{tpu_custom_call.1} parent=5 // pred_check_branch
        %100 = sbr.rel (%p97) target = $region24
      $region23: #{tpu_custom_call.1} parent=5 // pred_region
        %s101 = ssub.s32 %s11, 1
        // Predicated region
        $region25: #{tpu_custom_call.1} parent=23 // pred_check
          %p102 = pneg %p37
        $region26: #{tpu_custom_call.1} parent=23 // pred_check_branch
          %104 = sbr.rel (%p102) target = $region28
        $region27: #{tpu_custom_call.1} parent=23 // pred_region
          %105 = dma.done [#allocation3], 128
        $region28: #{tpu_custom_call.1} parent=23 // pred_fallthru
          _
        %p106 = pneg %p37
        %p107 = pneg %p34
        %p108 = pneg %p63
        %p109 = pneg %p60
        %s110 = sand.u32 %s50, 1
        %s111 = scalar_lea.sflag [#allocation4], %s110
        %s112 = sand.u32 %s50, 1
        %s113 = smul.addr %s112, 8
        %s114 = scalar_lea.vmem [#allocation5], %s113
        %v115 = vld [vmem:[#allocation2] sm:$0xff]
        %116 = vst [vmem:[%s114] sm:$0xff] %v115
        %s117 = sand.u32 %s50, 1
        %s118 = scalar_lea.sflag [#allocation4], %s117
        %s119 = sand.u32 %s50, 1
        %s120 = smul.addr %s119, 8
        %s121 = scalar_lea.vmem [#allocation5], %s120
        // Predicated region
        $region29: #{tpu_custom_call.1} parent=23 // pred_check
          %p122 = pneg %p60
        $region30: #{tpu_custom_call.1} parent=23 // pred_check_branch
          %124 = sbr.rel (%p122) target = $region32
        $region31: #{tpu_custom_call.1} parent=23 // pred_region
          %s126 = ssub.s32 128, 128
          %127 = vsyncadd %s118, %s126
          %s128 = smul.addr %s16, 128
          %s129 = scalar_lea.hbm %s1, %s128
          %s131 = sshll.u32 %s121, 4
          %s132 = int_to_ptr.vmem [resolvable:$true] %s131
          %134 = dma.vmem_to_hbm [thread:$0]  %s132, 128, %s129, %s118
        $region32: #{tpu_custom_call.1} parent=23 // pred_fallthru
          _
      $region24: #{tpu_custom_call.1} parent=5 // pred_fallthru
        _
      %p135 = scmp.le.s32.totalorder 2, %s11
      // Predicated region
      $region33: #{tpu_custom_call.1} parent=5 // pred_check
        %p136 = pneg %p135
      $region34: #{tpu_custom_call.1} parent=5 // pred_check_branch
        %138 = sbr.rel (%p136) target = $region36
      $region35: #{tpu_custom_call.1} parent=5 // pred_region
        %s139 = ssub.s32 %s11, 2
        // Predicated region
        $region37: #{tpu_custom_call.1} parent=35 // pred_check
          %p140 = pneg %p66
        $region38: #{tpu_custom_call.1} parent=35 // pred_check_branch
          %142 = sbr.rel (%p140) target = $region40
        $region39: #{tpu_custom_call.1} parent=35 // pred_region
          %s143 = sand.u32 %s51, 1
          %s144 = scalar_lea.sflag [#allocation4], %s143
          %s145 = sand.u32 %s51, 1
          %s146 = smul.addr %s145, 8
          %s147 = scalar_lea.vmem [#allocation5], %s146
          %148 = dma.done %s144, 128
        $region40: #{tpu_custom_call.1} parent=35 // pred_fallthru
          _
      $region36: #{tpu_custom_call.1} parent=5 // pred_fallthru
        _
    $region6: #{tpu_custom_call.1} parent=1 // loop_footer
      %s15 = sadd.s32 1, %s11
    $region7: #{tpu_custom_call.1} parent=1 // loop_footer_branch
      %10 = sbr.rel target = $region3
    $region8: #{tpu_custom_call.1} parent=1 // loop_exit
      _
    %149 = vsyncpa [#allocation3], 1
    %s150 = scalar_lea.sflag [#allocation3], 1
    %151 = vsyncpa %s150, 1
    %152 = vsyncpa [#allocation4], 1
    %s153 = scalar_lea.sflag [#allocation4], 1
    %154 = vsyncpa %s153, 1

// kernel: _downsample_conv.1
$region0: #{_downsample_conv.1}
  #allocation0 [shape = 'u32[]', space=smem, size = 0x4, offset = 0x4, fixed_abs, tag = 'smem constant byte address 0x4 - core index']
  #allocation1 [shape = 'u32[144,128]{1,0:T(1,128)}', space=vmem, size = 0x12000, scoped, tag = 'internal scratch']
  %s0 = inlined_call_operand.vmem [shape: f32[2,72,12], index: 0, kind: input, shape index: {}]
  %s1 = inlined_call_operand.vmem [shape: f32[2,72,12], index: 1, kind: input, shape index: {}]
  %s2 = inlined_call_operand.vmem [shape: f32[3,12,128], index: 2, kind: input, shape index: {}]
  %s3 = inlined_call_operand.vmem [shape: f32[1,128], index: 3, kind: input, shape index: {}]
  %s4 = inlined_call_operand.vmem [shape: f32[2,64,128], index: 4, kind: output, shape index: {}]
  %s5 = sld [smem:[#allocation0]]
  $region49: #{_downsample_conv.1} parent=0
    _
  %s7 = ssub.s32 1, %s5
  %s8 = scalar_select 0, %s7, %s5
  loop: start=0, step=1, limit=4
  $region2: #{_downsample_conv.1} parent=0 // loop_pre_header
    _
  $region3: #{_downsample_conv.1} parent=0 // loop_header
    %s10 = sphi 0, %s14
    %p11 = scmp.ge.s32.totalorder %s10, 4
    %s17 = sphi 0, %s29
    %s18 = sphi 0, %s25
    %s19 = sphi 0, %s17
    %s20 = sphi 0, %s18
    %s21 = sphi 0, %s19
    %s22 = sphi 0, %s20
    %s32 = sphi 0, %s34
    %s35 = sphi 0, %s32
    %s36 = sphi 0, %s35
    %s52 = sphi 0, %s36
    %s58 = sphi 0, %s60
    %s61 = sphi 0, %s58
    %s62 = sphi 0, %s61
    %s78 = sphi 0, %s62
    %s82 = sphi 0, %s82
    %s84 = sphi 0, %s82
    %s85 = sphi 0, %s84
    %s99 = sphi 0, %s85
    %s103 = sphi 0, %s103
    %s105 = sphi 0, %s103
    %s106 = sphi 0, %s105
    %s120 = sphi 0, %s106
    %s128 = sphi 0, %s130
    %s131 = sphi 0, %s128
    %s132 = sphi 0, %s131
    %s148 = sphi 0, %s132
  $region4: #{_downsample_conv.1} parent=0 // loop_header_branch
    %13 = sbr.rel (%p11) target = $region8
  $region5: #{_downsample_conv.1} parent=0 // loop_body
    %s15 = ssub.s32 %s10, 1
    %s16 = ssub.s32 %s10, 2
    %s23 = sadd.s32 1, %s18
    %p24 = scmp.ge.s32.totalorder %s23, 1
    %s25 = scalar_select %p24, 0, %s23
    %s26 = sadd.s32 1, %s17
    %s27 = scalar_select %p24, %s26, %s17
    %p28 = scmp.ge.s32.totalorder %s27, 2
    %s29 = scalar_select %p28, 0, %s27
    %s30 = ssub.s32 %s17, %s29
    %p31 = scmp.eq.s32.totalorder %s30, 0
    %s33 = sadd.s32 %s32, 1
    %s34 = scalar_select %p31, %s32, %s33
    %p37 = pneg %p31
    %p38 = scmp.eq.s32.totalorder %s10, 1
    %p39 = por %p37, %p38
    %p40 = scmp.ne.s32.totalorder %s32, %s35
    %p41 = scmp.eq.s32.totalorder %s10, 0
    %p42 = por %p40, %p41
    %p43 = scmp.ne.s32.totalorder %s32, %s35
    %p44 = scmp.eq.s32.totalorder %s15, 1
    %p45 = por %p43, %p44
    %p46 = scmp.ne.s32.totalorder %s35, %s36
    %p47 = scmp.eq.s32.totalorder %s15, 0
    %p48 = por %p46, %p47
    %p49 = scmp.ne.s32.totalorder %s35, %s36
    %p50 = scmp.eq.s32.totalorder %s16, 1
    %p51 = por %p49, %p50
    %p53 = scmp.ne.s32.totalorder %s36, %s52
    %p54 = scmp.eq.s32.totalorder %s16, 0
    %p55 = por %p53, %p54
    %s56 = ssub.s32 %s17, %s29
    %p57 = scmp.eq.s32.totalorder %s56, 0
    %s59 = sadd.s32 %s58, 1
    %s60 = scalar_select %p57, %s58, %s59
    %p63 = pneg %p57
    %p64 = scmp.eq.s32.totalorder %s10, 1
    %p65 = por %p63, %p64
    %p66 = scmp.ne.s32.totalorder %s58, %s61
    %p67 = scmp.eq.s32.totalorder %s10, 0
    %p68 = por %p66, %p67
    %p69 = scmp.ne.s32.totalorder %s58, %s61
    %p70 = scmp.eq.s32.totalorder %s15, 1
    %p71 = por %p69, %p70
    %p72 = scmp.ne.s32.totalorder %s61, %s62
    %p73 = scmp.eq.s32.totalorder %s15, 0
    %p74 = por %p72, %p73
    %p75 = scmp.ne.s32.totalorder %s61, %s62
    %p76 = scmp.eq.s32.totalorder %s16, 1
    %p77 = por %p75, %p76
    %p79 = scmp.ne.s32.totalorder %s62, %s78
    %p80 = scmp.eq.s32.totalorder %s16, 0
    %p81 = por %p79, %p80
    %s83 = sadd.s32 %s82, 1
    %p86 = scmp.eq.s32.totalorder %s10, 1
    %p87 = scmp.ne.s32.totalorder %s82, %s84
    %p88 = scmp.eq.s32.totalorder %s10, 0
    %p89 = por %p87, %p88
    %p90 = scmp.ne.s32.totalorder %s82, %s84
    %p91 = scmp.eq.s32.totalorder %s15, 1
    %p92 = por %p90, %p91
    %p93 = scmp.ne.s32.totalorder %s84, %s85
    %p94 = scmp.eq.s32.totalorder %s15, 0
    %p95 = por %p93, %p94
    %p96 = scmp.ne.s32.totalorder %s84, %s85
    %p97 = scmp.eq.s32.totalorder %s16, 1
    %p98 = por %p96, %p97
    %p100 = scmp.ne.s32.totalorder %s85, %s99
    %p101 = scmp.eq.s32.totalorder %s16, 0
    %p102 = por %p100, %p101
    %s104 = sadd.s32 %s103, 1
    %p107 = scmp.eq.s32.totalorder %s10, 1
    %p108 = scmp.ne.s32.totalorder %s103, %s105
    %p109 = scmp.eq.s32.totalorder %s10, 0
    %p110 = por %p108, %p109
    %p111 = scmp.ne.s32.totalorder %s103, %s105
    %p112 = scmp.eq.s32.totalorder %s15, 1
    %p113 = por %p111, %p112
    %p114 = scmp.ne.s32.totalorder %s105, %s106
    %p115 = scmp.eq.s32.totalorder %s15, 0
    %p116 = por %p114, %p115
    %p117 = scmp.ne.s32.totalorder %s105, %s106
    %p118 = scmp.eq.s32.totalorder %s16, 1
    %p119 = por %p117, %p118
    %p121 = scmp.ne.s32.totalorder %s106, %s120
    %p122 = scmp.eq.s32.totalorder %s16, 0
    %p123 = por %p121, %p122
    %s124 = ssub.s32 %s17, %s29
    %s125 = ssub.s32 %s18, %s25
    %s126 = sor.u32 %s124, %s125
    %p127 = scmp.eq.s32.totalorder %s126, 0
    %s129 = sadd.s32 %s128, 1
    %s130 = scalar_select %p127, %s128, %s129
    %p133 = pneg %p127
    %p134 = scmp.eq.s32.totalorder %s10, 1
    %p135 = por %p133, %p134
    %p136 = scmp.ne.s32.totalorder %s128, %s131
    %p137 = scmp.eq.s32.totalorder %s10, 0
    %p138 = por %p136, %p137
    %p139 = scmp.ne.s32.totalorder %s128, %s131
    %p140 = scmp.eq.s32.totalorder %s15, 1
    %p141 = por %p139, %p140
    %p142 = scmp.ne.s32.totalorder %s131, %s132
    %p143 = scmp.eq.s32.totalorder %s15, 0
    %p144 = por %p142, %p143
    %p145 = scmp.ne.s32.totalorder %s131, %s132
    %p146 = scmp.eq.s32.totalorder %s16, 1
    %p147 = por %p145, %p146
    %p149 = scmp.ne.s32.totalorder %s132, %s148
    %p150 = scmp.eq.s32.totalorder %s16, 0
    %p151 = por %p149, %p150
    %p152 = scmp.le.s32.totalorder 1, %s10
    %p153 = scmp.lt.s32.totalorder %s10, 3
    %p154 = pnand %p152, %p153
    %p155 = pneg %p154
    // Predicated region
    $region9: #{_downsample_conv.1} parent=5 // pred_check
      _
    $region10: #{_downsample_conv.1} parent=5 // pred_check_branch
      %157 = sbr.rel (%p154) target = $region12
    $region11: #{_downsample_conv.1} parent=5 // pred_region
      %s158 = ssub.s32 %s10, 1
      // Predicated region
      $region13: #{_downsample_conv.1} parent=11 // pred_check
        %p159 = pneg %p95
      $region14: #{_downsample_conv.1} parent=11 // pred_check_branch
        %161 = sbr.rel (%p159) target = $region16
      $region15: #{_downsample_conv.1} parent=11 // pred_region
        _
      $region16: #{_downsample_conv.1} parent=11 // pred_fallthru
        _
      // Predicated region
      $region17: #{_downsample_conv.1} parent=11 // pred_check
        %p162 = pneg %p116
      $region18: #{_downsample_conv.1} parent=11 // pred_check_branch
        %164 = sbr.rel (%p162) target = $region20
      $region19: #{_downsample_conv.1} parent=11 // pred_region
        _
      $region20: #{_downsample_conv.1} parent=11 // pred_fallthru
        _
    $region12: #{_downsample_conv.1} parent=5 // pred_fallthru
      _
    %p165 = scmp.lt.s32.totalorder %s10, 2
    // Predicated region
    $region21: #{_downsample_conv.1} parent=5 // pred_check
      %p166 = pneg %p165
    $region22: #{_downsample_conv.1} parent=5 // pred_check_branch
      %168 = sbr.rel (%p166) target = $region24
    $region23: #{_downsample_conv.1} parent=5 // pred_region
      // Predicated region
      $region25: #{_downsample_conv.1} parent=23 // pred_check
        %p169 = pneg %p42
      $region26: #{_downsample_conv.1} parent=23 // pred_check_branch
        %171 = sbr.rel (%p169) target = $region28
      $region27: #{_downsample_conv.1} parent=23 // pred_region
        %p172 = scmp.lt.s32.totalorder %s17, 1
        %s173 = scalar_select %p172, %s17, 1
        %s174 = smul.addr %s173, 9
        %s175 = smul.addr %s174, 8
        %s176 = scalar_lea.vmem %s0, %s175
      $region28: #{_downsample_conv.1} parent=23 // pred_fallthru
        _
      // Predicated region
      $region29: #{_downsample_conv.1} parent=23 // pred_check
        %p177 = pneg %p68
      $region30: #{_downsample_conv.1} parent=23 // pred_check_branch
        %179 = sbr.rel (%p177) target = $region32
      $region31: #{_downsample_conv.1} parent=23 // pred_region
        %p180 = scmp.lt.s32.totalorder %s17, 1
        %s181 = scalar_select %p180, %s17, 1
        %s182 = smul.addr %s181, 9
        %s183 = smul.addr %s182, 8
        %s184 = scalar_lea.vmem %s1, %s183
      $region32: #{_downsample_conv.1} parent=23 // pred_fallthru
        _
    $region24: #{_downsample_conv.1} parent=5 // pred_fallthru
      _
    %p185 = scmp.le.s32.totalorder 1, %s10
    %p186 = scmp.lt.s32.totalorder %s10, 3
    %p187 = pnand %p185, %p186
    %p188 = pneg %p187
    // Predicated region
    $region33: #{_downsample_conv.1} parent=5 // pred_check
      _
    $region34: #{_downsample_conv.1} parent=5 // pred_check_branch
      %190 = sbr.rel (%p187) target = $region36
    $region35: #{_downsample_conv.1} parent=5 // pred_region
      %s191 = ssub.s32 %s10, 1
      %p192 = scmp.lt.s32.totalorder %s19, 1
      %s193 = scalar_select %p192, %s19, 1
      %s194 = smul.addr %s193, 9
      %s195 = smul.addr %s194, 8
      %s196 = scalar_lea.vmem %s0, %s195
      %p197 = pneg %p48
      %p198 = pneg %p45
      %p199 = scmp.lt.s32.totalorder %s19, 1
      %s200 = scalar_select %p199, %s19, 1
      %s201 = smul.addr %s200, 9
      %s202 = smul.addr %s201, 8
      %s203 = scalar_lea.vmem %s1, %s202
      %p204 = pneg %p74
      %p205 = pneg %p71
      %p206 = pneg %p95
      %p207 = pneg %p92
      %p208 = pneg %p116
      %p209 = pneg %p113
      %p210 = pneg %p144
      %p211 = pneg %p141
      %s212 = smul.u32 8, %s20
      %p213 = scmp.lt.s32.totalorder %s19, 1
      %s214 = scalar_select %p213, %s19, 1
      %p215 = scmp.lt.s32.totalorder %s212, 7
      %s216 = scalar_select %p215, %s212, 7
      %s217 = smul.addr %s214, 8
      %s218 = sadd.s32 %s216, %s217
      %s219 = smul.addr %s218, 8
      %s220 = scalar_lea.vmem %s4, %s219
      %p221 = scmp.lt.s32.totalorder %s19, 1
      %s222 = scalar_select %p221, %s19, 1
      %s223 = smul.addr %s222, 9
      %s224 = smul.addr %s223, 8
      %s225 = scalar_lea.vmem %s0, %s224
      %p226 = scmp.lt.s32.totalorder %s19, 1
      %s227 = scalar_select %p226, %s19, 1
      %s228 = smul.addr %s227, 9
      %s229 = smul.addr %s228, 8
      %s230 = scalar_lea.vmem %s1, %s229
      %s231 = smul.u32 8, %s20
      %p232 = scmp.lt.s32.totalorder %s19, 1
      %s233 = scalar_select %p232, %s19, 1
      %p234 = scmp.lt.s32.totalorder %s231, 7
      %s235 = scalar_select %p234, %s231, 7
      %s236 = smul.addr %s233, 8
      %s237 = sadd.s32 %s235, %s236
      %s238 = smul.addr %s237, 8
      %s239 = scalar_lea.vmem %s4, %s238
      %s240 = smul.u32 8, %s20
      %s241 = smul.u32 %s20, 64
      %v242 = vld [vmem:[%s3] sm:$0x1]
      %v244 = vlaneseq
      %v245 = vshrl.u32 %v244, 7
      %v246 = vsub.s32 0, %v245
      %v247 = vrot.slane %v242, %v246
      %s249 = scalar_lea.vmem %s225, %s241
      %v250 = vld [vmem:[%s249] sm:$0xff]
      %v251 = vld [vmem:[%s249 + $0x8] sm:$0xff]
      %v252 = vld [vmem:[%s249 + $0x10] sm:$0xff]
      %v253 = vld [vmem:[%s249 + $0x18] sm:$0xff]
      %v254 = vld [vmem:[%s249 + $0x20] sm:$0xff]
      %v255 = vld [vmem:[%s249 + $0x28] sm:$0xff]
      %v256 = vld [vmem:[%s249 + $0x30] sm:$0xff]
      %v257 = vld [vmem:[%s249 + $0x38] sm:$0xff]
      %v258 = vld [vmem:[%s2] sm:$0xff]
      %v259 = vld [vmem:[%s2 + $0x8] sm:$0xf]
      %vm260 = vcmask 97280
      %v262 = vsel %vm260, %v250, 0
      %v265 = vsel %vm260, %v251, 0
      %v268 = vsel %vm260, %v252, 0
      %v271 = vsel %vm260, %v253, 0
      %v274 = vsel %vm260, %v254, 0
      %v277 = vsel %vm260, %v255, 0
      %v280 = vsel %vm260, %v256, 0
      %v283 = vsel %vm260, %v257, 0
      %vm285 = vcmask 1043456
      %v287 = vsel %vm285, %v259, 0
      %289 = vmatprep.subr.mxu0 0.0
      %290 = vmatpush1.msra.mxu0 %v258
      %291 = vmatprep.subr.mxu0 0.0
      %292 = vmatpush1.msra.mxu0 %v287
      %293 = vmatprep.subr.mxu0 0.0
      %294 = vmatpush1.msra.mxu0 0.0
      %295 = vmatprep.subr.mxu0 0.0
      %296 = vmatpush1.msra.mxu0 0.0
      %297 = vmatprep.subr.mxu0 0.0
      %298 = vmatpush1.msra.mxu0 0.0
      %299 = vmatprep.subr.mxu0 0.0
      %300 = vmatpush1.msra.mxu0 0.0
      %301 = vmatprep.subr.mxu0 0.0
      %302 = vmatpush1.msra.mxu0 0.0
      %303 = vmatprep.subr.mxu0 0.0
      %304 = vmatpush1.msra.mxu0 0.0
      %305 = vmatprep.subr.mxu0 0.0
      %306 = vmatpush1.msra.mxu0 0.0
      %307 = vmatprep.subr.mxu0 0.0
      %308 = vmatpush1.msra.mxu0 0.0
      %309 = vmatprep.subr.mxu0 0.0
      %310 = vmatpush1.msra.mxu0 0.0
      %311 = vmatprep.subr.mxu0 0.0
      %312 = vmatpush1.msra.mxu0 0.0
      %313 = vmatprep.subr.mxu0 0.0
      %314 = vmatpush1.msra.mxu0 0.0
      %315 = vmatprep.subr.mxu0 0.0
      %316 = vmatpush1.msra.mxu0 0.0
      %317 = vmatprep.subr.mxu0 0.0
      %318 = vmatpush1.msra.mxu0 0.0
      %319 = vmatprep.subr.mxu0 0.0
      %320 = vmatpush1.msra.mxu0 0.0
      %321 = vmatprep.subr.mxu0 0.0
      %322 = vmatpush1.msra.mxu0 0.0
      %323 = vmatprep.subr.mxu0 0.0
      %324 = vmatpush1.msra.mxu0 0.0
      %325 = vmatprep.subr.mxu0 0.0
      %326 = vmatpush1.msra.mxu0 0.0
      %327 = vmatprep.subr.mxu0 0.0
      %328 = vmatpush1.msra.mxu0 0.0
      %329 = vmatprep.subr.mxu0 0.0
      %330 = vmatpush1.msra.mxu0 0.0
      %331 = vmatprep.subr.mxu0 0.0
      %332 = vmatpush1.msra.mxu0 0.0
      %333 = vmatprep.subr.mxu0 0.0
      %334 = vmatpush1.msra.mxu0 0.0
      %335 = vmatprep.subr.mxu0 0.0
      %336 = vmatpush1.msra.mxu0 0.0
      %337 = vmatprep.subr.mxu0 0.0
      %338 = vmatpush1.msra.mxu0 0.0
      %339 = vmatprep.subr.mxu0 0.0
      %340 = vmatpush1.msra.mxu0 0.0
      %341 = vmatprep.subr.mxu0 0.0
      %342 = vmatpush1.msra.mxu0 0.0
      %343 = vmatprep.subr.mxu0 0.0
      %344 = vmatpush1.msra.mxu0 0.0
      %345 = vmatprep.subr.mxu0 0.0
      %346 = vmatpush1.msra.mxu0 0.0
      %347 = vmatprep.subr.mxu0 0.0
      %348 = vmatpush1.msra.mxu0 0.0
      %349 = vmatprep.subr.mxu0 0.0
      %350 = vmatpush1.msra.mxu0 0.0
      %351 = vmatprep.subr.mxu0 0.0
      %352 = vmatpush1.msra.mxu0 0.0
      %353 = vmatprep.mubr.f32.mxu0 0.0
      %354 = vmatmul.mubr.f32.gmra.mrb[0].mxu0 %v262
      %v355 = vpop.f32.mrb[0].mxu0
      %v356 = vadd.f32 0.0, %v355
      %v357 = vpop.f32.mrb[0].mxu0
      %358 = vmatprep.mubr.f32.mxu0 0.0
      %359 = vmatmul.mubr.f32.gmra.mrb[0].mxu0 %v265
      %v360 = vpop.f32.mrb[0].mxu0
      %v361 = vadd.f32 0.0, %v360
      %v362 = vpop.f32.mrb[0].mxu0
      %363 = vmatprep.mubr.f32.mxu0 0.0
      %364 = vmatmul.mubr.f32.gmra.mrb[0].mxu0 %v268
      %v365 = vpop.f32.mrb[0].mxu0
      %v366 = vadd.f32 0.0, %v365
      %v367 = vpop.f32.mrb[0].mxu0
      %368 = vmatprep.mubr.f32.mxu0 0.0
      %369 = vmatmul.mubr.f32.gmra.mrb[0].mxu0 %v271
      %v370 = vpop.f32.mrb[0].mxu0
      %v371 = vadd.f32 0.0, %v370
      %v372 = vpop.f32.mrb[0].mxu0
      %373 = vmatprep.mubr.f32.mxu0 0.0
      %374 = vmatmul.mubr.f32.gmra.mrb[0].mxu0 %v274
      %v375 = vpop.f32.mrb[0].mxu0
      %v376 = vadd.f32 0.0, %v375
      %v377 = vpop.f32.mrb[0].mxu0
      %378 = vmatprep.mubr.f32.mxu0 0.0
      %379 = vmatmul.mubr.f32.gmra.mrb[0].mxu0 %v277
      %v380 = vpop.f32.mrb[0].mxu0
      %v381 = vadd.f32 0.0, %v380
      %v382 = vpop.f32.mrb[0].mxu0
      %383 = vmatprep.mubr.f32.mxu0 0.0
      %384 = vmatmul.mubr.f32.gmra.mrb[0].mxu0 %v280
      %v385 = vpop.f32.mrb[0].mxu0
      %v386 = vadd.f32 0.0, %v385
      %v387 = vpop.f32.mrb[0].mxu0
      %388 = vmatprep.mubr.f32.mxu0 0.0
      %389 = vmatmul.mubr.f32.gmra.mrb[0].mxu0 %v283
      %v390 = vpop.f32.mrb[0].mxu0
      %v391 = vadd.f32 0.0, %v390
      %v392 = vpop.f32.mrb[0].mxu0
      %393 = vdwg.mxu0
      %v394 = vadd.f32 %v247, %v356
      %v395 = vadd.f32 %v247, %v361
      %v396 = vadd.f32 %v247, %v366
      %v397 = vadd.f32 %v247, %v371
      %v398 = vadd.f32 %v247, %v376
      %v399 = vadd.f32 %v247, %v381
      %v400 = vadd.f32 %v247, %v386
      %v401 = vadd.f32 %v247, %v391
      %s402 = scalar_lea.vmem %s230, %s241
      %v403 = vld [vmem:[%s402] sm:$0xff]
      %v404 = vld [vmem:[%s402 + $0x8] sm:$0xff]
      %v405 = vld [vmem:[%s402 + $0x10] sm:$0xff]
      %v406 = vld [vmem:[%s402 + $0x18] sm:$0xff]
      %v407 = vld [vmem:[%s402 + $0x20] sm:$0xff]
      %v408 = vld [vmem:[%s402 + $0x28] sm:$0xff]
      %v409 = vld [vmem:[%s402 + $0x30] sm:$0xff]
      %v410 = vld [vmem:[%s402 + $0x38] sm:$0xff]
      %s411 = scalar_lea.vmem %s2, 16
      %v412 = vld [vmem:[%s411] sm:$0xff]
      %v413 = vld [vmem:[%s411 + $0x8] sm:$0xf]
      %v415 = vsel %vm260, %v403, 0
      %v418 = vsel %vm260, %v404, 0
      %v421 = vsel %vm260, %v405, 0
      %v424 = vsel %vm260, %v406, 0
      %v427 = vsel %vm260, %v407, 0
      %v430 = vsel %vm260, %v408, 0
      %v433 = vsel %vm260, %v409, 0
      %v436 = vsel %vm260, %v410, 0
      %v439 = vsel %vm285, %v413, 0
      %441 = vmatprep.subr.mxu0 0.0
      %442 = vmatpush1.msra.mxu0 %v412
      %443 = vmatprep.subr.mxu0 0.0
      %444 = vmatpush1.msra.mxu0 %v439
      %445 = vmatprep.subr.mxu0 0.0
      %446 = vmatpush1.msra.mxu0 0.0
      %447 = vmatprep.subr.mxu0 0.0
      %448 = vmatpush1.msra.mxu0 0.0
      %449 = vmatprep.subr.mxu0 0.0
      %450 = vmatpush1.msra.mxu0 0.0
      %451 = vmatprep.subr.mxu0 0.0
      %452 = vmatpush1.msra.mxu0 0.0
      %453 = vmatprep.subr.mxu0 0.0
      %454 = vmatpush1.msra.mxu0 0.0
      %455 = vmatprep.subr.mxu0 0.0
      %456 = vmatpush1.msra.mxu0 0.0
      %457 = vmatprep.subr.mxu0 0.0
      %458 = vmatpush1.msra.mxu0 0.0
      %459 = vmatprep.subr.mxu0 0.0
      %460 = vmatpush1.msra.mxu0 0.0
      %461 = vmatprep.subr.mxu0 0.0
      %462 = vmatpush1.msra.mxu0 0.0
      %463 = vmatprep.subr.mxu0 0.0
      %464 = vmatpush1.msra.mxu0 0.0
      %465 = vmatprep.subr.mxu0 0.0
      %466 = vmatpush1.msra.mxu0 0.0
      %467 = vmatprep.subr.mxu0 0.0
      %468 = vmatpush1.msra.mxu0 0.0
      %469 = vmatprep.subr.mxu0 0.0
      %470 = vmatpush1.msra.mxu0 0.0
      %471 = vmatprep.subr.mxu0 0.0
      %472 = vmatpush1.msra.mxu0 0.0
      %473 = vmatprep.subr.mxu0 0.0
      %474 = vmatpush1.msra.mxu0 0.0
      %475 = vmatprep.subr.mxu0 0.0
      %476 = vmatpush1.msra.mxu0 0.0
      %477 = vmatprep.subr.mxu0 0.0
      %478 = vmatpush1.msra.mxu0 0.0
      %479 = vmatprep.subr.mxu0 0.0
      %480 = vmatpush1.msra.mxu0 0.0
      %481 = vmatprep.subr.mxu0 0.0
      %482 = vmatpush1.msra.mxu0 0.0
      %483 = vmatprep.subr.mxu0 0.0
      %484 = vmatpush1.msra.mxu0 0.0
      %485 = vmatprep.subr.mxu0 0.0
      %486 = vmatpush1.msra.mxu0 0.0
      %487 = vmatprep.subr.mxu0 0.0
      %488 = vmatpush1.msra.mxu0 0.0
      %489 = vmatprep.subr.mxu0 0.0
      %490 = vmatpush1.msra.mxu0 0.0
      %491 = vmatprep.subr.mxu0 0.0
      %492 = vmatpush1.msra.mxu0 0.0
      %493 = vmatprep.subr.mxu0 0.0
      %494 = vmatpush1.msra.mxu0 0.0
      %495 = vmatprep.subr.mxu0 0.0
      %496 = vmatpush1.msra.mxu0 0.0
      %497 = vmatprep.subr.mxu0 0.0
      %498 = vmatpush1.msra.mxu0 0.0
      %499 = vmatprep.subr.mxu0 0.0
      %500 = vmatpush1.msra.mxu0 0.0
      %501 = vmatprep.subr.mxu0 0.0
      %502 = vmatpush1.msra.mxu0 0.0
      %503 = vmatprep.subr.mxu0 0.0
      %504 = vmatpush1.msra.mxu0 0.0
      %505 = vmatprep.mubr.f32.mxu0 0.0
      %506 = vmatmul.mubr.f32.gmra.mrb[0].mxu0 %v415
      %v507 = vpop.f32.mrb[0].mxu0
      %v508 = vadd.f32 0.0, %v507
      %v509 = vpop.f32.mrb[0].mxu0
      %510 = vmatprep.mubr.f32.mxu0 0.0
      %511 = vmatmul.mubr.f32.gmra.mrb[0].mxu0 %v418
      %v512 = vpop.f32.mrb[0].mxu0
      %v513 = vadd.f32 0.0, %v512
      %v514 = vpop.f32.mrb[0].mxu0
      %515 = vmatprep.mubr.f32.mxu0 0.0
      %516 = vmatmul.mubr.f32.gmra.mrb[0].mxu0 %v421
      %v517 = vpop.f32.mrb[0].mxu0
      %v518 = vadd.f32 0.0, %v517
      %v519 = vpop.f32.mrb[0].mxu0
      %520 = vmatprep.mubr.f32.mxu0 0.0
      %521 = vmatmul.mubr.f32.gmra.mrb[0].mxu0 %v424
      %v522 = vpop.f32.mrb[0].mxu0
      %v523 = vadd.f32 0.0, %v522
      %v524 = vpop.f32.mrb[0].mxu0
      %525 = vmatprep.mubr.f32.mxu0 0.0
      %526 = vmatmul.mubr.f32.gmra.mrb[0].mxu0 %v427
      %v527 = vpop.f32.mrb[0].mxu0
      %v528 = vadd.f32 0.0, %v527
      %v529 = vpop.f32.mrb[0].mxu0
      %530 = vmatprep.mubr.f32.mxu0 0.0
      %531 = vmatmul.mubr.f32.gmra.mrb[0].mxu0 %v430
      %v532 = vpop.f32.mrb[0].mxu0
      %v533 = vadd.f32 0.0, %v532
      %v534 = vpop.f32.mrb[0].mxu0
      %535 = vmatprep.mubr.f32.mxu0 0.0
      %536 = vmatmul.mubr.f32.gmra.mrb[0].mxu0 %v433
      %v537 = vpop.f32.mrb[0].mxu0
      %v538 = vadd.f32 0.0, %v537
      %v539 = vpop.f32.mrb[0].mxu0
      %540 = vmatprep.mubr.f32.mxu0 0.0
      %541 = vmatmul.mubr.f32.gmra.mrb[0].mxu0 %v436
      %v542 = vpop.f32.mrb[0].mxu0
      %v543 = vadd.f32 0.0, %v542
      %v544 = vpop.f32.mrb[0].mxu0
      %545 = vdwg.mxu0
      %v546 = vadd.f32 %v394, %v508
      %v547 = vadd.f32 %v395, %v513
      %v548 = vadd.f32 %v396, %v518
      %v549 = vadd.f32 %v397, %v523
      %v550 = vadd.f32 %v398, %v528
      %v551 = vadd.f32 %v399, %v533
      %v552 = vadd.f32 %v400, %v538
      %v553 = vadd.f32 %v401, %v543
      %s554 = sadd.s32 %s241, 8
      %s555 = scalar_lea.vmem %s225, %s554
      %v556 = vld [vmem:[%s555] sm:$0xff]
      %v557 = vld [vmem:[%s555 + $0x8] sm:$0xff]
      %v558 = vld [vmem:[%s555 + $0x10] sm:$0xff]
      %v559 = vld [vmem:[%s555 + $0x18] sm:$0xff]
      %v560 = vld [vmem:[%s555 + $0x20] sm:$0xff]
      %v561 = vld [vmem:[%s555 + $0x28] sm:$0xff]
      %v562 = vld [vmem:[%s555 + $0x30] sm:$0xff]
      %v563 = vld [vmem:[%s555 + $0x38] sm:$0xff]
      %s564 = scalar_lea.vmem %s2, 32
      %v565 = vld [vmem:[%s564] sm:$0xff]
      %v566 = vld [vmem:[%s564 + $0x8] sm:$0xf]
      %v568 = vsel %vm260, %v556, 0
      %v571 = vsel %vm260, %v557, 0
      %v574 = vsel %vm260, %v558, 0
      %v577 = vsel %vm260, %v559, 0
      %v580 = vsel %vm260, %v560, 0
      %v583 = vsel %vm260, %v561, 0
      %v586 = vsel %vm260, %v562, 0
      %v589 = vsel %vm260, %v563, 0
      %v592 = vsel %vm285, %v566, 0
      %594 = vmatprep.subr.mxu0 0.0
      %595 = vmatpush1.msra.mxu0 %v565
      %596 = vmatprep.subr.mxu0 0.0
      %597 = vmatpush1.msra.mxu0 %v592
      %598 = vmatprep.subr.mxu0 0.0
      %599 = vmatpush1.msra.mxu0 0.0
      %600 = vmatprep.subr.mxu0 0.0
      %601 = vmatpush1.msra.mxu0 0.0
      %602 = vmatprep.subr.mxu0 0.0
      %603 = vmatpush1.msra.mxu0 0.0
      %604 = vmatprep.subr.mxu0 0.0
      %605 = vmatpush1.msra.mxu0 0.0
      %606 = vmatprep.subr.mxu0 0.0
      %607 = vmatpush1.msra.mxu0 0.0
      %608 = vmatprep.subr.mxu0 0.0
      %609 = vmatpush1.msra.mxu0 0.0
      %610 = vmatprep.subr.mxu0 0.0
      %611 = vmatpush1.msra.mxu0 0.0
      %612 = vmatprep.subr.mxu0 0.0
      %613 = vmatpush1.msra.mxu0 0.0
      %614 = vmatprep.subr.mxu0 0.0
      %615 = vmatpush1.msra.mxu0 0.0
      %616 = vmatprep.subr.mxu0 0.0
      %617 = vmatpush1.msra.mxu0 0.0
      %618 = vmatprep.subr.mxu0 0.0
      %619 = vmatpush1.msra.mxu0 0.0
      %620 = vmatprep.subr.mxu0 0.0
      %621 = vmatpush1.msra.mxu0 0.0
      %622 = vmatprep.subr.mxu0 0.0
      %623 = vmatpush1.msra.mxu0 0.0
      %624 = vmatprep.subr.mxu0 0.0
      %625 = vmatpush1.msra.mxu0 0.0
      %626 = vmatprep.subr.mxu0 0.0
      %627 = vmatpush1.msra.mxu0 0.0
      %628 = vmatprep.subr.mxu0 0.0
      %629 = vmatpush1.msra.mxu0 0.0
      %630 = vmatprep.subr.mxu0 0.0
      %631 = vmatpush1.msra.mxu0 0.0
      %632 = vmatprep.subr.mxu0 0.0
      %633 = vmatpush1.msra.mxu0 0.0
      %634 = vmatprep.subr.mxu0 0.0
      %635 = vmatpush1.msra.mxu0 0.0
      %636 = vmatprep.subr.mxu0 0.0
      %637 = vmatpush1.msra.mxu0 0.0
      %638 = vmatprep.subr.mxu0 0.0
      %639 = vmatpush1.msra.mxu0 0.0
      %640 = vmatprep.subr.mxu0 0.0
      %641 = vmatpush1.msra.mxu0 0.0
      %642 = vmatprep.subr.mxu0 0.0
      %643 = vmatpush1.msra.mxu0 0.0
      %644 = vmatprep.subr.mxu0 0.0
      %645 = vmatpush1.msra.mxu0 0.0
      %646 = vmatprep.subr.mxu0 0.0
      %647 = vmatpush1.msra.mxu0 0.0
      %648 = vmatprep.subr.mxu0 0.0
      %649 = vmatpush1.msra.mxu0 0.0
      %650 = vmatprep.subr.mxu0 0.0
      %651 = vmatpush1.msra.mxu0 0.0
      %652 = vmatprep.subr.mxu0 0.0
      %653 = vmatpush1.msra.mxu0 0.0
      %654 = vmatprep.subr.mxu0 0.0
      %655 = vmatpush1.msra.mxu0 0.0
      %656 = vmatprep.subr.mxu0 0.0
      %657 = vmatpush1.msra.mxu0 0.0
      %658 = vmatprep.mubr.f32.mxu0 0.0
      %659 = vmatmul.mubr.f32.gmra.mrb[0].mxu0 %v568
      %v660 = vpop.f32.mrb[0].mxu0
      %v661 = vadd.f32 0.0, %v660
      %v662 = vpop.f32.mrb[0].mxu0
      %663 = vmatprep.mubr.f32.mxu0 0.0
      %664 = vmatmul.mubr.f32.gmra.mrb[0].mxu0 %v571
      %v665 = vpop.f32.mrb[0].mxu0
      %v666 = vadd.f32 0.0, %v665
      %v667 = vpop.f32.mrb[0].mxu0
      %668 = vmatprep.mubr.f32.mxu0 0.0
      %669 = vmatmul.mubr.f32.gmra.mrb[0].mxu0 %v574
      %v670 = vpop.f32.mrb[0].mxu0
      %v671 = vadd.f32 0.0, %v670
      %v672 = vpop.f32.mrb[0].mxu0
      %673 = vmatprep.mubr.f32.mxu0 0.0
      %674 = vmatmul.mubr.f32.gmra.mrb[0].mxu0 %v577
      %v675 = vpop.f32.mrb[0].mxu0
      %v676 = vadd.f32 0.0, %v675
      %v677 = vpop.f32.mrb[0].mxu0
      %678 = vmatprep.mubr.f32.mxu0 0.0
      %679 = vmatmul.mubr.f32.gmra.mrb[0].mxu0 %v580
      %v680 = vpop.f32.mrb[0].mxu0
      %v681 = vadd.f32 0.0, %v680
      %v682 = vpop.f32.mrb[0].mxu0
      %683 = vmatprep.mubr.f32.mxu0 0.0
      %684 = vmatmul.mubr.f32.gmra.mrb[0].mxu0 %v583
      %v685 = vpop.f32.mrb[0].mxu0
      %v686 = vadd.f32 0.0, %v685
      %v687 = vpop.f32.mrb[0].mxu0
      %688 = vmatprep.mubr.f32.mxu0 0.0
      %689 = vmatmul.mubr.f32.gmra.mrb[0].mxu0 %v586
      %v690 = vpop.f32.mrb[0].mxu0
      %v691 = vadd.f32 0.0, %v690
      %v692 = vpop.f32.mrb[0].mxu0
      %693 = vmatprep.mubr.f32.mxu0 0.0
      %694 = vmatmul.mubr.f32.gmra.mrb[0].mxu0 %v589
      %v695 = vpop.f32.mrb[0].mxu0
      %v696 = vadd.f32 0.0, %v695
      %v697 = vpop.f32.mrb[0].mxu0
      %698 = vdwg.mxu0
      %v699 = vadd.f32 %v546, %v661
      %v700 = vadd.f32 %v547, %v666
      %v701 = vadd.f32 %v548, %v671
      %v702 = vadd.f32 %v549, %v676
      %v703 = vadd.f32 %v550, %v681
      %v704 = vadd.f32 %v551, %v686
      %v705 = vadd.f32 %v552, %v691
      %v706 = vadd.f32 %v553, %v696
      %707 = vst [vmem:[%s239] sm:$0xff] %v699
      %708 = vst [vmem:[%s239 + $0x8] sm:$0xff] %v700
      %709 = vst [vmem:[%s239 + $0x10] sm:$0xff] %v701
      %710 = vst [vmem:[%s239 + $0x18] sm:$0xff] %v702
      %711 = vst [vmem:[%s239 + $0x20] sm:$0xff] %v703
      %712 = vst [vmem:[%s239 + $0x28] sm:$0xff] %v704
      %713 = vst [vmem:[%s239 + $0x30] sm:$0xff] %v705
      %714 = vst [vmem:[%s239 + $0x38] sm:$0xff] %v706
      %s715 = smul.u32 8, %s20
      %p716 = scmp.lt.s32.totalorder %s19, 1
      %s717 = scalar_select %p716, %s19, 1
      %p718 = scmp.lt.s32.totalorder %s715, 7
      %s719 = scalar_select %p718, %s715, 7
      %s720 = smul.addr %s717, 8
      %s721 = sadd.s32 %s719, %s720
      %s722 = smul.addr %s721, 8
      %s723 = scalar_lea.vmem %s4, %s722
      // Predicated region
      $region37: #{_downsample_conv.1} parent=35 // pred_check
        %p724 = pneg %p141
      $region38: #{_downsample_conv.1} parent=35 // pred_check_branch
        %726 = sbr.rel (%p724) target = $region40
      $region39: #{_downsample_conv.1} parent=35 // pred_region
        %s727 = smul.u32 8, %s20
      $region40: #{_downsample_conv.1} parent=35 // pred_fallthru
        _
    $region36: #{_downsample_conv.1} parent=5 // pred_fallthru
      _
    %p728 = scmp.le.s32.totalorder 2, %s10
    // Predicated region
    $region41: #{_downsample_conv.1} parent=5 // pred_check
      %p729 = pneg %p728
    $region42: #{_downsample_conv.1} parent=5 // pred_check_branch
      %731 = sbr.rel (%p729) target = $region44
    $region43: #{_downsample_conv.1} parent=5 // pred_region
      %s732 = ssub.s32 %s10, 2
      // Predicated region
      $region45: #{_downsample_conv.1} parent=43 // pred_check
        %p733 = pneg %p147
      $region46: #{_downsample_conv.1} parent=43 // pred_check_branch
        %735 = sbr.rel (%p733) target = $region48
      $region47: #{_downsample_conv.1} parent=43 // pred_region
        %s736 = smul.u32 8, %s22
        %p737 = scmp.lt.s32.totalorder %s21, 1
        %s738 = scalar_select %p737, %s21, 1
        %p739 = scmp.lt.s32.totalorder %s736, 7
        %s740 = scalar_select %p739, %s736, 7
        %s741 = smul.addr %s738, 8
        %s742 = sadd.s32 %s740, %s741
        %s743 = smul.addr %s742, 8
        %s744 = scalar_lea.vmem %s4, %s743
      $region48: #{_downsample_conv.1} parent=43 // pred_fallthru
        _
    $region44: #{_downsample_conv.1} parent=5 // pred_fallthru
      _
  $region6: #{_downsample_conv.1} parent=0 // loop_footer
    %s14 = sadd.s32 1, %s10
  $region7: #{_downsample_conv.1} parent=0 // loop_footer_branch
    %9 = sbr.rel target = $region3
  $region8: #{_downsample_conv.1} parent=0 // loop_exit
    _

</llo_original>
